<compile_context>
chip_gen: v5e
topology: v5e:2x2
jax: 0.10.0
libtpu: 0.0.40
codegen_flags: <defaults>
</compile_context>

<pallas_src>
import math

import jax
import jax.numpy as jnp
from jax.experimental import pallas as pl
from jax.experimental.pallas import tpu as pltpu

HIDDEN = 768
BOTTLENECK = 32


# ----------------------------------------------------------------------------- kernel
def _adapter_kernel(x_ref, wd_ref, bd_ref, wu_ref, bu_ref, o_ref):
    # x_ref:  (TM, 768)   wd_ref: (768, 32)  bd_ref: (1, 32)
    # wu_ref: (32, 768)   bu_ref: (1, 768)   o_ref:  (TM, 768)
    # MXU inputs are bf16 (single-pass on the bf16 MXU); accumulation stays f32.
    x = x_ref[...].astype(jnp.bfloat16)
    h = jnp.dot(x, wd_ref[...].astype(jnp.bfloat16),
                preferred_element_type=jnp.float32)
    h = jnp.maximum(h + bd_ref[...].astype(jnp.float32), 0.0)          # bias + ReLU
    y = jnp.dot(h.astype(jnp.bfloat16), wu_ref[...].astype(jnp.bfloat16),
                preferred_element_type=jnp.float32)
    y = y + bu_ref[...].astype(jnp.float32)
    o_ref[...] = y.astype(o_ref.dtype)


# -------------------------------------------------------------------------- tiling cfg
def _round_up(x, m):
    return ((x + m - 1) // m) * m


def _tpu_tiling_config():
    """Best-effort per-generation knobs: (max row tile, TensorCores per chip)."""
    kind = ""
    try:
        d = jax.devices()[0]
        if d.platform == "tpu":
            kind = d.device_kind.lower()
    except Exception:  # pragma: no cover - defensive; fall back to conservative values
        pass
    if "v7" in kind:
        return 2048, 2          # 2 TCs: big tiles only when >=2 steps/TC remain
    if "v6" in kind:
        return 2048, 1          # 1 TC, 128 MiB physical VMEM: big tiles are free
    if "v5 lite" in kind or "v5e" in kind or "v5lite" in kind:
        return 1024, 1          # stay friendly to the 16 MiB scoped-VMEM default
    return 1024, 1              # conservative default for anything else


def _choose_tm(m, max_tm, num_tc):
    """Row tile: multiple of 8, as large as possible.

    Single-TC chips (v5e/v6e): one tile when M fits (no forced split -> no extra
    per-step overhead).  Multi-TC chips (v7x): cap at ceil(M / (2*num_tc)) so the
    'parallel' axis keeps >= 2 grid steps per core and double-buffering overlaps."""
    m8 = max(8, _round_up(m, 8))
    if num_tc <= 1:
        return min(max_tm, m8)
    min_steps = 2 * num_tc
    tm = max(8, (pl.cdiv(m, min_steps) // 8) * 8)
    return min(max_tm, tm)


# ------------------------------------------------------------------------------ entry
@jax.jit
def bert_adapter(x, w_down, b_down, w_up, b_up):
    """x: (..., 768). w_down: (768, 32), w_up: (32, 768) (input-major, i.e. x @ W).

    MXU compute is bf16 with f32 accumulation regardless of storage dtype.  Output
    dtype follows x; running the surrounding model in bf16 halves the dominant HBM
    traffic (activations), which is the only meaningful perf lever for this kernel."""
    assert x.shape[-1] == HIDDEN, f"last dim must be {HIDDEN}, got {x.shape}"
    orig_shape = x.shape
    x2 = x.reshape(-1, HIDDEN)
    M = x2.shape[0]

    max_tm, num_tc = _tpu_tiling_config()
    tm = _choose_tm(M, max_tm, num_tc)
    grid = pl.cdiv(M, tm)            # ragged last block handled by Pallas (no jnp.pad)

    bd = b_down.reshape(1, BOTTLENECK)
    bu = b_up.reshape(1, HIDDEN)

    act_isz = jnp.dtype(x.dtype).itemsize
    w_isz = jnp.dtype(w_down.dtype).itemsize
    cost = pl.CostEstimate(
        flops=4 * M * HIDDEN * BOTTLENECK,                       # two GEMMs
        bytes_accessed=2 * M * HIDDEN * act_isz                  # x read + out write
        + 2 * HIDDEN * BOTTLENECK * w_isz                        # both weight matrices
        + BOTTLENECK * jnp.dtype(b_down.dtype).itemsize
        + HIDDEN * jnp.dtype(b_up.dtype).itemsize,
        transcendentals=0,
    )

    # Scoped-VMEM budget: double-buffered x/out tiles + (double-buffered) weights/biases
    # + compute headroom.  Weights could be single-buffered (constant index map) but the
    # savings (~0.4 MiB) are irrelevant at this budget.
    tile_bytes = tm * HIDDEN * act_isz
    weight_bytes = 2 * (HIDDEN * BOTTLENECK + HIDDEN + BOTTLENECK) * w_isz
    vmem_needed = 2 * 2 * tile_bytes + 2 * weight_bytes + (4 << 20)
    vmem_limit = int(min(max(vmem_needed, 32 << 20), 48 << 20))   # << physical on v5e-v7x

    out = pl.pallas_call(
        _adapter_kernel,
        out_shape=jax.ShapeDtypeStruct((M, HIDDEN), x.dtype),
        grid_spec=pltpu.PrefetchScalarGridSpec(
            num_scalar_prefetch=0,
            grid=(grid,),
            in_specs=[
                pl.BlockSpec((tm, HIDDEN), lambda i: (i, 0)),           # x rows (streamed)
                pl.BlockSpec((HIDDEN, BOTTLENECK), lambda i: (0, 0)),   # down weight (resident)
                pl.BlockSpec((1, BOTTLENECK), lambda i: (0, 0)),        # down bias
                pl.BlockSpec((BOTTLENECK, HIDDEN), lambda i: (0, 0)),   # up weight (resident)
                pl.BlockSpec((1, HIDDEN), lambda i: (0, 0)),            # up bias
            ],
            out_specs=pl.BlockSpec((tm, HIDDEN), lambda i: (i, 0)),
        ),
        compiler_params=pltpu.CompilerParams(
            dimension_semantics=("parallel",),
            vmem_limit_bytes=vmem_limit,
        ),
        cost_estimate=cost,
    )(x2, w_down, bd, w_up, bu)

    return out.reshape(orig_shape)


# ------------------------------------------------------------------------------ helpers
def init_params(key, dtype=jnp.float32):
    """Deterministic parameter init matching the module's shapes (stored input-major).

    NOTE: the original module zero-inits up.weight and both biases (forward output is
    identically zero); here we use deterministic random values so the kernel computes
    something verifiable.  The forward math (x@Wd + bd -> ReLU -> @Wu + bu) is identical."""
    k1, k2, k3, k4 = jax.random.split(key, 4)
    gain = math.sqrt(2.0 / (1.0 + 5.0))                 # kaiming_uniform_(a=sqrt(5))
    bound_down = gain * math.sqrt(3.0 / HIDDEN)
    w_down = jax.random.uniform(k1, (HIDDEN, BOTTLENECK), jnp.float32,
                                minval=-bound_down, maxval=bound_down)
    b_down = jax.random.uniform(k2, (BOTTLENECK,), jnp.float32, -0.1, 0.1)
    bound_up = gain * math.sqrt(3.0 / BOTTLENECK)
    w_up = jax.random.uniform(k3, (BOTTLENECK, HIDDEN), jnp.float32,
                              minval=-bound_up, maxval=bound_up)
    b_up = jax.random.uniform(k4, (HIDDEN,), jnp.float32, -0.1, 0.1)
    return (w_down.astype(dtype), b_down.astype(dtype),
            w_up.astype(dtype), b_up.astype(dtype))


def reference(x, w_down, b_down, w_up, b_up):
    h = jnp.maximum(x @ w_down + b_down, 0.0)
    return h @ w_up + b_up


# -------------------------------------------------------------------------------- main
if __name__ == "__main__":
    key = jax.random.PRNGKey(0)
    kx, kp = jax.random.split(key)

    # Small shapes: batch=2, seq=8; hidden=768 is fixed by the module.
    x = jax.random.normal(kx, (2, 8, HIDDEN), dtype=jnp.float32)
    w_down, b_down, w_up, b_up = init_params(kp)
    ref = reference(x, w_down, b_down, w_up, b_up)

    # f32 storage; MXU compute is bf16 with f32 accumulation -> loose-ish tolerance.
    out = jax.block_until_ready(bert_adapter(x, w_down, b_down, w_up, b_up))
    assert out.shape == x.shape and out.dtype == x.dtype
    assert jnp.allclose(out, ref, atol=5e-2, rtol=5e-2), "f32-storage path mismatch"

    # bf16 activations + weights (the actual bandwidth lever; out follows x.dtype).
    out_bf16 = jax.block_until_ready(
        bert_adapter(x.astype(jnp.bfloat16),
                     w_down.astype(jnp.bfloat16), b_down.astype(jnp.bfloat16),
                     w_up.astype(jnp.bfloat16), b_up.astype(jnp.bfloat16)))
    assert out_bf16.dtype == jnp.bfloat16
    assert jnp.allclose(out_bf16.astype(jnp.float32), ref, atol=6e-2, rtol=6e-2), \
        "bf16-activation path mismatch"

    # Row count not a multiple of 8 / the tile -> exercises the ragged last block
    # (no wrapper-side pad copy anymore).
    x_odd = jax.random.normal(kx, (3, 7, HIDDEN), dtype=jnp.float32)
    out_odd = jax.block_until_ready(bert_adapter(x_odd, w_down, b_down, w_up, b_up))
    assert jnp.allclose(out_odd, reference(x_odd, w_down, b_down, w_up, b_up),
                        atol=5e-2, rtol=5e-2), "ragged-path mismatch"

    # The module's default init (zero up.weight / biases) makes the forward output zero.
    zeros = jax.block_until_ready(
        bert_adapter(x, w_down, jnp.zeros_like(b_down),
                     jnp.zeros_like(w_up), jnp.zeros_like(b_up)))
    assert jnp.all(zeros == 0.0), "default-init (zero) semantics mismatch"

    print("KERNEL_OK")
</pallas_src>

<mosaic_0001>
module attributes {stable_mosaic.version = 11 : i64} {
  func.func @_adapter_kernel(%arg0: i32, %arg1: memref<16x768xf32, #tpu.memory_space<vmem>>, %arg2: memref<768x32xf32, #tpu.memory_space<vmem>>, %arg3: memref<1x32xf32, #tpu.memory_space<vmem>>, %arg4: memref<32x768xf32, #tpu.memory_space<vmem>>, %arg5: memref<1x768xf32, #tpu.memory_space<vmem>>, %arg6: memref<16x768xf32, #tpu.memory_space<vmem>>) attributes {dimension_semantics = [#tpu.dimension_semantics<parallel>], iteration_bounds = array<i64: 1>, scalar_prefetch = 0 : i64, scratch_operands = 0 : i64, tpu.core_type = #tpu.core_type<tc>, window_params = [{transform_indices = @transform_0, window_bounds = array<i64: 16, 768>}, {pipeline_mode = #tpu.pipeline_mode<synchronous>, transform_indices = @transform_1, window_bounds = array<i64: 768, 32>}, {pipeline_mode = #tpu.pipeline_mode<synchronous>, transform_indices = @transform_2, window_bounds = array<i64: 1, 32>}, {pipeline_mode = #tpu.pipeline_mode<synchronous>, transform_indices = @transform_3, window_bounds = array<i64: 32, 768>}, {pipeline_mode = #tpu.pipeline_mode<synchronous>, transform_indices = @transform_4, window_bounds = array<i64: 1, 768>}, {transform_indices = @transform_5, window_bounds = array<i64: 16, 768>}]} {
    %c0 = arith.constant 0 : index
    %c0_0 = arith.constant 0 : index
    %0 = vector.load %arg1[%c0, %c0_0] : memref<16x768xf32, #tpu.memory_space<vmem>>, vector<16x768xf32>
    %1 = arith.truncf %0 : vector<16x768xf32> to vector<16x768xbf16>
    %c0_1 = arith.constant 0 : index
    %c0_2 = arith.constant 0 : index
    %2 = vector.load %arg2[%c0_1, %c0_2] : memref<768x32xf32, #tpu.memory_space<vmem>>, vector<768x32xf32>
    %3 = arith.truncf %2 : vector<768x32xf32> to vector<768x32xbf16>
    %cst = arith.constant dense<0.000000e+00> : vector<16x32xf32>
    %4 = tpu.matmul %1, %3, %cst {dimension_numbers = #tpu.dot_dimension_numbers<[1], [0], [0], [1], [0, 0, 1, 1], [], []>} : vector<16x768xbf16>, vector<768x32xbf16>, vector<16x32xf32> -> vector<16x32xf32>
    %c0_3 = arith.constant 0 : index
    %c0_4 = arith.constant 0 : index
    %5 = vector.load %arg3[%c0_3, %c0_4] : memref<1x32xf32, #tpu.memory_space<vmem>>, vector<1x32xf32>
    %6 = vector.broadcast %5 : vector<1x32xf32> to vector<16x32xf32>
    %7 = arith.addf %4, %6 : vector<16x32xf32>
    %cst_5 = arith.constant 0.000000e+00 : f32
    %8 = vector.broadcast %cst_5 : f32 to vector<16x32xf32>
    %9 = arith.maximumf %7, %8 : vector<16x32xf32>
    %10 = arith.truncf %9 : vector<16x32xf32> to vector<16x32xbf16>
    %c0_6 = arith.constant 0 : index
    %c0_7 = arith.constant 0 : index
    %11 = vector.load %arg4[%c0_6, %c0_7] : memref<32x768xf32, #tpu.memory_space<vmem>>, vector<32x768xf32>
    %12 = arith.truncf %11 : vector<32x768xf32> to vector<32x768xbf16>
    %cst_8 = arith.constant dense<0.000000e+00> : vector<16x768xf32>
    %13 = tpu.matmul %10, %12, %cst_8 {dimension_numbers = #tpu.dot_dimension_numbers<[1], [0], [0], [1], [0, 0, 1, 1], [], []>} : vector<16x32xbf16>, vector<32x768xbf16>, vector<16x768xf32> -> vector<16x768xf32>
    %c0_9 = arith.constant 0 : index
    %c0_10 = arith.constant 0 : index
    %14 = vector.load %arg5[%c0_9, %c0_10] : memref<1x768xf32, #tpu.memory_space<vmem>>, vector<1x768xf32>
    %15 = vector.broadcast %14 : vector<1x768xf32> to vector<16x768xf32>
    %16 = arith.addf %13, %15 : vector<16x768xf32>
    %c0_11 = arith.constant 0 : index
    %c0_12 = arith.constant 0 : index
    %17 = vector.load %arg6[%c0_11, %c0_12] : memref<16x768xf32, #tpu.memory_space<vmem>>, vector<16x768xf32>
    tpu.vector_store %arg6[%c0_11, %c0_12], %16 {strides = array<i32>} : memref<16x768xf32, #tpu.memory_space<vmem>>, vector<16x768xf32>,
    return
  }
  func.func @transform_0(%arg0: i32) -> (i32, i32) {
    %c0_i32 = arith.constant 0 : i32
    %c0_i32_0 = arith.constant 0 : i32
    return %arg0, %c0_i32 : i32, i32
  }
  func.func @transform_1(%arg0: i32) -> (i32, i32) {
    %c0_i32 = arith.constant 0 : i32
    %c0_i32_0 = arith.constant 0 : i32
    %c0_i32_1 = arith.constant 0 : i32
    return %c0_i32, %c0_i32_0 : i32, i32
  }
  func.func @transform_2(%arg0: i32) -> (i32, i32) {
    %c0_i32 = arith.constant 0 : i32
    %c0_i32_0 = arith.constant 0 : i32
    %c0_i32_1 = arith.constant 0 : i32
    return %c0_i32, %c0_i32_0 : i32, i32
  }
  func.func @transform_3(%arg0: i32) -> (i32, i32) {
    %c0_i32 = arith.constant 0 : i32
    %c0_i32_0 = arith.constant 0 : i32
    %c0_i32_1 = arith.constant 0 : i32
    return %c0_i32, %c0_i32_0 : i32, i32
  }
  func.func @transform_4(%arg0: i32) -> (i32, i32) {
    %c0_i32 = arith.constant 0 : i32
    %c0_i32_0 = arith.constant 0 : i32
    %c0_i32_1 = arith.constant 0 : i32
    return %c0_i32, %c0_i32_0 : i32, i32
  }
  func.func @transform_5(%arg0: i32) -> (i32, i32) {
    %c0_i32 = arith.constant 0 : i32
    %c0_i32_0 = arith.constant 0 : i32
    return %arg0, %c0_i32 : i32, i32
  }
}

</mosaic_0001>

<llo_original>
// kernel: bert_adapter.1
$region0: #{bert_adapter.1}
  #allocation0 [shape = 'u32[]', space=smem, size = 0x4, offset = 0x4, fixed_abs, tag = 'smem constant byte address 0x4 - core index']
  #allocation1 [shape = 'u32[72,128]{1,0:T(1,128)}', space=vmem, size = 0x9000, scoped, tag = 'internal scratch']
  %s0 = inlined_call_operand.vmem [shape: f32[16,768], index: 0, kind: input, shape index: {}]
  %s1 = inlined_call_operand.vmem [shape: f32[768,32], index: 1, kind: input, shape index: {}]
  %s2 = inlined_call_operand.vmem [shape: f32[1,32], index: 2, kind: input, shape index: {}]
  %s3 = inlined_call_operand.vmem [shape: f32[32,768], index: 3, kind: input, shape index: {}]
  %s4 = inlined_call_operand.vmem [shape: f32[1,768], index: 4, kind: input, shape index: {}]
  %s5 = inlined_call_operand.hbm [shape: f32[16,768], index: 5, kind: output, shape index: {}]
  %s6 = sld [smem:[#allocation0]]
  $region30: #{bert_adapter.1} parent=0
    _
  %s8 = ssub.s32 1, %s6
  %s9 = scalar_select 0, %s8, %s6
  $region1: #{bert_adapter.1} parent=0
    #allocation2 [shape = 'u8[49152]{0}', space=vmem, size = 0xc000, scoped, tag = 'output window, operand 0, single buffered']
    #allocation3 [shape = 's32[1]{0}', space=sflag, size = 0x4, scoped, tag = 'scoped memory for bert_adapter.1']
    %10 = vsyncpa [#allocation3], 0
    // Predicated region
    $region2: #{bert_adapter.1} parent=1 // pred_check
      _
    $region3: #{bert_adapter.1} parent=1 // pred_check_branch
      %12 = sbr.rel (0) target = $region5
    $region4: #{bert_adapter.1} parent=1 // pred_region
      _
    $region5: #{bert_adapter.1} parent=1 // pred_fallthru
      _
    // Predicated region
    $region6: #{bert_adapter.1} parent=1 // pred_check
      _
    $region7: #{bert_adapter.1} parent=1 // pred_check_branch
      %14 = sbr.rel (0) target = $region9
    $region8: #{bert_adapter.1} parent=1 // pred_region
      _
    $region9: #{bert_adapter.1} parent=1 // pred_fallthru
      _
    // Predicated region
    $region10: #{bert_adapter.1} parent=1 // pred_check
      _
    $region11: #{bert_adapter.1} parent=1 // pred_check_branch
      %16 = sbr.rel (0) target = $region13
    $region12: #{bert_adapter.1} parent=1 // pred_region
      _
    $region13: #{bert_adapter.1} parent=1 // pred_fallthru
      _
    // Predicated region
    $region14: #{bert_adapter.1} parent=1 // pred_check
      _
    $region15: #{bert_adapter.1} parent=1 // pred_check_branch
      %18 = sbr.rel (0) target = $region17
    $region16: #{bert_adapter.1} parent=1 // pred_region
      _
    $region17: #{bert_adapter.1} parent=1 // pred_fallthru
      _
    // Predicated region
    $region18: #{bert_adapter.1} parent=1 // pred_check
      _
    $region19: #{bert_adapter.1} parent=1 // pred_check_branch
      %20 = sbr.rel (0) target = $region21
    $region20: #{bert_adapter.1} parent=1 // pred_region
      _
    $region21: #{bert_adapter.1} parent=1 // pred_fallthru
      _
    %v22 = vld [vmem:[%s0] sm:$0xff]
    %v23 = vld [vmem:[%s0 + $0x8] sm:$0xff]
    %v24 = vld [vmem:[%s0 + $0x10] sm:$0xff]
    %v25 = vld [vmem:[%s0 + $0x18] sm:$0xff]
    %v26 = vld [vmem:[%s0 + $0x20] sm:$0xff]
    %v27 = vld [vmem:[%s0 + $0x28] sm:$0xff]
    %v28 = vld [vmem:[%s0 + $0x30] sm:$0xff]
    %v29 = vld [vmem:[%s0 + $0x38] sm:$0xff]
    %v30 = vld [vmem:[%s0 + $0x40] sm:$0xff]
    %v31 = vld [vmem:[%s0 + $0x48] sm:$0xff]
    %v32 = vld [vmem:[%s0 + $0x50] sm:$0xff]
    %v33 = vld [vmem:[%s0 + $0x58] sm:$0xff]
    %v34 = vpack.c.bf16 %v28, %v22
    %v35 = vpack.c.bf16 %v29, %v23
    %v36 = vpack.c.bf16 %v30, %v24
    %v37 = vpack.c.bf16 %v31, %v25
    %v38 = vpack.c.bf16 %v32, %v26
    %v39 = vpack.c.bf16 %v33, %v27
    %v40 = vld [vmem:[%s1] sm:$0xff]
    %v41 = vld [vmem:[%s1 + $0x8] sm:$0xff]
    %v42 = vld [vmem:[%s1 + $0x10] sm:$0xff]
    %v43 = vld [vmem:[%s1 + $0x18] sm:$0xff]
    %v44 = vld [vmem:[%s1 + $0x20] sm:$0xff]
    %v45 = vld [vmem:[%s1 + $0x28] sm:$0xff]
    %v46 = vld [vmem:[%s1 + $0x30] sm:$0xff]
    %v47 = vld [vmem:[%s1 + $0x38] sm:$0xff]
    %v48 = vld [vmem:[%s1 + $0x40] sm:$0xff]
    %v49 = vld [vmem:[%s1 + $0x48] sm:$0xff]
    %v50 = vld [vmem:[%s1 + $0x50] sm:$0xff]
    %v51 = vld [vmem:[%s1 + $0x58] sm:$0xff]
    %v52 = vld [vmem:[%s1 + $0x60] sm:$0xff]
    %v53 = vld [vmem:[%s1 + $0x68] sm:$0xff]
    %v54 = vld [vmem:[%s1 + $0x70] sm:$0xff]
    %v55 = vld [vmem:[%s1 + $0x78] sm:$0xff]
    %v56 = vld [vmem:[%s1 + $0x80] sm:$0xff]
    %v57 = vld [vmem:[%s1 + $0x88] sm:$0xff]
    %v58 = vld [vmem:[%s1 + $0x90] sm:$0xff]
    %v59 = vld [vmem:[%s1 + $0x98] sm:$0xff]
    %v60 = vld [vmem:[%s1 + $0xa0] sm:$0xff]
    %v61 = vld [vmem:[%s1 + $0xa8] sm:$0xff]
    %v62 = vld [vmem:[%s1 + $0xb0] sm:$0xff]
    %v63 = vld [vmem:[%s1 + $0xb8] sm:$0xff]
    %v64 = vld [vmem:[%s1 + $0xc0] sm:$0xff]
    %v65 = vld [vmem:[%s1 + $0xc8] sm:$0xff]
    %v66 = vld [vmem:[%s1 + $0xd0] sm:$0xff]
    %v67 = vld [vmem:[%s1 + $0xd8] sm:$0xff]
    %v68 = vld [vmem:[%s1 + $0xe0] sm:$0xff]
    %v69 = vld [vmem:[%s1 + $0xe8] sm:$0xff]
    %v70 = vld [vmem:[%s1 + $0xf0] sm:$0xff]
    %v71 = vld [vmem:[%s1 + $0xf8] sm:$0xff]
    %v72 = vld [vmem:[%s1 + $0x100] sm:$0xff]
    %v73 = vld [vmem:[%s1 + $0x108] sm:$0xff]
    %v74 = vld [vmem:[%s1 + $0x110] sm:$0xff]
    %v75 = vld [vmem:[%s1 + $0x118] sm:$0xff]
    %v76 = vld [vmem:[%s1 + $0x120] sm:$0xff]
    %v77 = vld [vmem:[%s1 + $0x128] sm:$0xff]
    %v78 = vld [vmem:[%s1 + $0x130] sm:$0xff]
    %v79 = vld [vmem:[%s1 + $0x138] sm:$0xff]
    %v80 = vld [vmem:[%s1 + $0x140] sm:$0xff]
    %v81 = vld [vmem:[%s1 + $0x148] sm:$0xff]
    %v82 = vld [vmem:[%s1 + $0x150] sm:$0xff]
    %v83 = vld [vmem:[%s1 + $0x158] sm:$0xff]
    %v84 = vld [vmem:[%s1 + $0x160] sm:$0xff]
    %v85 = vld [vmem:[%s1 + $0x168] sm:$0xff]
    %v86 = vld [vmem:[%s1 + $0x170] sm:$0xff]
    %v87 = vld [vmem:[%s1 + $0x178] sm:$0xff]
    %v88 = vld [vmem:[%s1 + $0x180] sm:$0xff]
    %v89 = vld [vmem:[%s1 + $0x188] sm:$0xff]
    %v90 = vld [vmem:[%s1 + $0x190] sm:$0xff]
    %v91 = vld [vmem:[%s1 + $0x198] sm:$0xff]
    %v92 = vld [vmem:[%s1 + $0x1a0] sm:$0xff]
    %v93 = vld [vmem:[%s1 + $0x1a8] sm:$0xff]
    %v94 = vld [vmem:[%s1 + $0x1b0] sm:$0xff]
    %v95 = vld [vmem:[%s1 + $0x1b8] sm:$0xff]
    %v96 = vld [vmem:[%s1 + $0x1c0] sm:$0xff]
    %v97 = vld [vmem:[%s1 + $0x1c8] sm:$0xff]
    %v98 = vld [vmem:[%s1 + $0x1d0] sm:$0xff]
    %v99 = vld [vmem:[%s1 + $0x1d8] sm:$0xff]
    %v100 = vld [vmem:[%s1 + $0x1e0] sm:$0xff]
    %v101 = vld [vmem:[%s1 + $0x1e8] sm:$0xff]
    %v102 = vld [vmem:[%s1 + $0x1f0] sm:$0xff]
    %v103 = vld [vmem:[%s1 + $0x1f8] sm:$0xff]
    %v104 = vld [vmem:[%s1 + $0x200] sm:$0xff]
    %v105 = vld [vmem:[%s1 + $0x208] sm:$0xff]
    %v106 = vld [vmem:[%s1 + $0x210] sm:$0xff]
    %v107 = vld [vmem:[%s1 + $0x218] sm:$0xff]
    %v108 = vld [vmem:[%s1 + $0x220] sm:$0xff]
    %v109 = vld [vmem:[%s1 + $0x228] sm:$0xff]
    %v110 = vld [vmem:[%s1 + $0x230] sm:$0xff]
    %v111 = vld [vmem:[%s1 + $0x238] sm:$0xff]
    %v112 = vld [vmem:[%s1 + $0x240] sm:$0xff]
    %v113 = vld [vmem:[%s1 + $0x248] sm:$0xff]
    %v114 = vld [vmem:[%s1 + $0x250] sm:$0xff]
    %v115 = vld [vmem:[%s1 + $0x258] sm:$0xff]
    %v116 = vld [vmem:[%s1 + $0x260] sm:$0xff]
    %v117 = vld [vmem:[%s1 + $0x268] sm:$0xff]
    %v118 = vld [vmem:[%s1 + $0x270] sm:$0xff]
    %v119 = vld [vmem:[%s1 + $0x278] sm:$0xff]
    %v120 = vld [vmem:[%s1 + $0x280] sm:$0xff]
    %v121 = vld [vmem:[%s1 + $0x288] sm:$0xff]
    %v122 = vld [vmem:[%s1 + $0x290] sm:$0xff]
    %v123 = vld [vmem:[%s1 + $0x298] sm:$0xff]
    %v124 = vld [vmem:[%s1 + $0x2a0] sm:$0xff]
    %v125 = vld [vmem:[%s1 + $0x2a8] sm:$0xff]
    %v126 = vld [vmem:[%s1 + $0x2b0] sm:$0xff]
    %v127 = vld [vmem:[%s1 + $0x2b8] sm:$0xff]
    %v128 = vld [vmem:[%s1 + $0x2c0] sm:$0xff]
    %v129 = vld [vmem:[%s1 + $0x2c8] sm:$0xff]
    %v130 = vld [vmem:[%s1 + $0x2d0] sm:$0xff]
    %v131 = vld [vmem:[%s1 + $0x2d8] sm:$0xff]
    %v132 = vld [vmem:[%s1 + $0x2e0] sm:$0xff]
    %v133 = vld [vmem:[%s1 + $0x2e8] sm:$0xff]
    %v134 = vld [vmem:[%s1 + $0x2f0] sm:$0xff]
    %v135 = vld [vmem:[%s1 + $0x2f8] sm:$0xff]
    %v136 = vpack.c.bf16 %v41, %v40
    %v137 = vpack.c.bf16 %v43, %v42
    %v138 = vpack.c.bf16 %v45, %v44
    %v139 = vpack.c.bf16 %v47, %v46
    %v140 = vpack.c.bf16 %v49, %v48
    %v141 = vpack.c.bf16 %v51, %v50
    %v142 = vpack.c.bf16 %v53, %v52
    %v143 = vpack.c.bf16 %v55, %v54
    %v144 = vpack.c.bf16 %v57, %v56
    %v145 = vpack.c.bf16 %v59, %v58
    %v146 = vpack.c.bf16 %v61, %v60
    %v147 = vpack.c.bf16 %v63, %v62
    %v148 = vpack.c.bf16 %v65, %v64
    %v149 = vpack.c.bf16 %v67, %v66
    %v150 = vpack.c.bf16 %v69, %v68
    %v151 = vpack.c.bf16 %v71, %v70
    %v152 = vpack.c.bf16 %v73, %v72
    %v153 = vpack.c.bf16 %v75, %v74
    %v154 = vpack.c.bf16 %v77, %v76
    %v155 = vpack.c.bf16 %v79, %v78
    %v156 = vpack.c.bf16 %v81, %v80
    %v157 = vpack.c.bf16 %v83, %v82
    %v158 = vpack.c.bf16 %v85, %v84
    %v159 = vpack.c.bf16 %v87, %v86
    %v160 = vpack.c.bf16 %v89, %v88
    %v161 = vpack.c.bf16 %v91, %v90
    %v162 = vpack.c.bf16 %v93, %v92
    %v163 = vpack.c.bf16 %v95, %v94
    %v164 = vpack.c.bf16 %v97, %v96
    %v165 = vpack.c.bf16 %v99, %v98
    %v166 = vpack.c.bf16 %v101, %v100
    %v167 = vpack.c.bf16 %v103, %v102
    %v168 = vpack.c.bf16 %v105, %v104
    %v169 = vpack.c.bf16 %v107, %v106
    %v170 = vpack.c.bf16 %v109, %v108
    %v171 = vpack.c.bf16 %v111, %v110
    %v172 = vpack.c.bf16 %v113, %v112
    %v173 = vpack.c.bf16 %v115, %v114
    %v174 = vpack.c.bf16 %v117, %v116
    %v175 = vpack.c.bf16 %v119, %v118
    %v176 = vpack.c.bf16 %v121, %v120
    %v177 = vpack.c.bf16 %v123, %v122
    %v178 = vpack.c.bf16 %v125, %v124
    %v179 = vpack.c.bf16 %v127, %v126
    %v180 = vpack.c.bf16 %v129, %v128
    %v181 = vpack.c.bf16 %v131, %v130
    %v182 = vpack.c.bf16 %v133, %v132
    %v183 = vpack.c.bf16 %v135, %v134
    %v184 = vld [vmem:[%s2] sm:$0x1]
    %v186 = vperm.slane %v184, 0
    %188 = vmatpush.bf16.msra.mxu0 %v143
    %189 = vmatpush.bf16.msra.mxu0 %v142
    %190 = vmatpush.bf16.msra.mxu0 %v141
    %191 = vmatpush.bf16.msra.mxu0 %v140
    %192 = vmatpush.bf16.msra.mxu0 %v139
    %193 = vmatpush.bf16.msra.mxu0 %v138
    %194 = vmatpush.bf16.msra.mxu0 %v137
    %195 = vmatpush.bf16.msra.mxu0 %v136
    %196 = vmatmul.bf16.gmra.mxu0 %v34
    %v197 = vpop.f32.mrf.mxu0
    %v198 = vadd.f32 %v186, %v197
    %v199 = vpop.f32.mrf.mxu0
    %v200 = vadd.f32 %v186, %v199
    %201 = vdwg.mxu0
    %202 = vmatpush.bf16.msra.mxu0 %v151
    %203 = vmatpush.bf16.msra.mxu0 %v150
    %204 = vmatpush.bf16.msra.mxu0 %v149
    %205 = vmatpush.bf16.msra.mxu0 %v148
    %206 = vmatpush.bf16.msra.mxu0 %v147
    %207 = vmatpush.bf16.msra.mxu0 %v146
    %208 = vmatpush.bf16.msra.mxu0 %v145
    %209 = vmatpush.bf16.msra.mxu0 %v144
    %210 = vmatmul.bf16.gmra.mxu0 %v35
    %v211 = vpop.f32.mrf.mxu0
    %v212 = vadd.f32 %v198, %v211
    %v213 = vpop.f32.mrf.mxu0
    %v214 = vadd.f32 %v200, %v213
    %215 = vdwg.mxu0
    %216 = vmatpush.bf16.msra.mxu0 %v159
    %217 = vmatpush.bf16.msra.mxu0 %v158
    %218 = vmatpush.bf16.msra.mxu0 %v157
    %219 = vmatpush.bf16.msra.mxu0 %v156
    %220 = vmatpush.bf16.msra.mxu0 %v155
    %221 = vmatpush.bf16.msra.mxu0 %v154
    %222 = vmatpush.bf16.msra.mxu0 %v153
    %223 = vmatpush.bf16.msra.mxu0 %v152
    %224 = vmatmul.bf16.gmra.mxu0 %v36
    %v225 = vpop.f32.mrf.mxu0
    %v226 = vadd.f32 %v212, %v225
    %v227 = vpop.f32.mrf.mxu0
    %v228 = vadd.f32 %v214, %v227
    %229 = vdwg.mxu0
    %230 = vmatpush.bf16.msra.mxu0 %v167
    %231 = vmatpush.bf16.msra.mxu0 %v166
    %232 = vmatpush.bf16.msra.mxu0 %v165
    %233 = vmatpush.bf16.msra.mxu0 %v164
    %234 = vmatpush.bf16.msra.mxu0 %v163
    %235 = vmatpush.bf16.msra.mxu0 %v162
    %236 = vmatpush.bf16.msra.mxu0 %v161
    %237 = vmatpush.bf16.msra.mxu0 %v160
    %238 = vmatmul.bf16.gmra.mxu0 %v37
    %v239 = vpop.f32.mrf.mxu0
    %v240 = vadd.f32 %v226, %v239
    %v241 = vpop.f32.mrf.mxu0
    %v242 = vadd.f32 %v228, %v241
    %243 = vdwg.mxu0
    %244 = vmatpush.bf16.msra.mxu0 %v175
    %245 = vmatpush.bf16.msra.mxu0 %v174
    %246 = vmatpush.bf16.msra.mxu0 %v173
    %247 = vmatpush.bf16.msra.mxu0 %v172
    %248 = vmatpush.bf16.msra.mxu0 %v171
    %249 = vmatpush.bf16.msra.mxu0 %v170
    %250 = vmatpush.bf16.msra.mxu0 %v169
    %251 = vmatpush.bf16.msra.mxu0 %v168
    %252 = vmatmul.bf16.gmra.mxu0 %v38
    %v253 = vpop.f32.mrf.mxu0
    %v254 = vadd.f32 %v240, %v253
    %v255 = vpop.f32.mrf.mxu0
    %v256 = vadd.f32 %v242, %v255
    %257 = vdwg.mxu0
    %258 = vmatpush.bf16.msra.mxu0 %v183
    %259 = vmatpush.bf16.msra.mxu0 %v182
    %260 = vmatpush.bf16.msra.mxu0 %v181
    %261 = vmatpush.bf16.msra.mxu0 %v180
    %262 = vmatpush.bf16.msra.mxu0 %v179
    %263 = vmatpush.bf16.msra.mxu0 %v178
    %264 = vmatpush.bf16.msra.mxu0 %v177
    %265 = vmatpush.bf16.msra.mxu0 %v176
    %266 = vmatmul.bf16.gmra.mxu0 %v39
    %v267 = vpop.f32.mrf.mxu0
    %v268 = vadd.f32 %v254, %v267
    %v269 = vpop.f32.mrf.mxu0
    %v270 = vadd.f32 %v256, %v269
    %271 = vdwg.mxu0
    %v272 = vmax.f32 %v268, 0.0
    %v273 = vmax.f32 %v270, 0.0
    %v274 = vpack.c.bf16 %v273, %v272
    %v275 = vld [vmem:[%s3] sm:$0xff]
    %v276 = vld [vmem:[%s3 + $0x8] sm:$0xff]
    %v277 = vld [vmem:[%s3 + $0x10] sm:$0xff]
    %v278 = vld [vmem:[%s3 + $0x18] sm:$0xff]
    %v279 = vld [vmem:[%s3 + $0x20] sm:$0xff]
    %v280 = vld [vmem:[%s3 + $0x28] sm:$0xff]
    %v281 = vld [vmem:[%s3 + $0x30] sm:$0xff]
    %v282 = vld [vmem:[%s3 + $0x38] sm:$0xff]
    %v283 = vld [vmem:[%s3 + $0x40] sm:$0xff]
    %v284 = vld [vmem:[%s3 + $0x48] sm:$0xff]
    %v285 = vld [vmem:[%s3 + $0x50] sm:$0xff]
    %v286 = vld [vmem:[%s3 + $0x58] sm:$0xff]
    %v287 = vld [vmem:[%s3 + $0x60] sm:$0xff]
    %v288 = vld [vmem:[%s3 + $0x68] sm:$0xff]
    %v289 = vld [vmem:[%s3 + $0x70] sm:$0xff]
    %v290 = vld [vmem:[%s3 + $0x78] sm:$0xff]
    %v291 = vld [vmem:[%s3 + $0x80] sm:$0xff]
    %v292 = vld [vmem:[%s3 + $0x88] sm:$0xff]
    %v293 = vld [vmem:[%s3 + $0x90] sm:$0xff]
    %v294 = vld [vmem:[%s3 + $0x98] sm:$0xff]
    %v295 = vld [vmem:[%s3 + $0xa0] sm:$0xff]
    %v296 = vld [vmem:[%s3 + $0xa8] sm:$0xff]
    %v297 = vld [vmem:[%s3 + $0xb0] sm:$0xff]
    %v298 = vld [vmem:[%s3 + $0xb8] sm:$0xff]
    %v299 = vpack.c.bf16 %v281, %v275
    %v300 = vpack.c.bf16 %v282, %v276
    %v301 = vpack.c.bf16 %v283, %v277
    %v302 = vpack.c.bf16 %v284, %v278
    %v303 = vpack.c.bf16 %v285, %v279
    %v304 = vpack.c.bf16 %v286, %v280
    %v305 = vpack.c.bf16 %v293, %v287
    %v306 = vpack.c.bf16 %v294, %v288
    %v307 = vpack.c.bf16 %v295, %v289
    %v308 = vpack.c.bf16 %v296, %v290
    %v309 = vpack.c.bf16 %v297, %v291
    %v310 = vpack.c.bf16 %v298, %v292
    %v311 = vld [vmem:[%s4] sm:$0x3f]
    %v313 = vperm.slane %v311, 0
    %v314 = vperm.slane %v311, 1
    %v315 = vperm.slane %v311, 2
    %v316 = vperm.slane %v311, 3
    %v317 = vperm.slane %v311, 4
    %v318 = vperm.slane %v311, 5
    %vm325 = vcmask 261120
    %v327 = vsel %vm325, %v274, 0
    %329 = vmatpush.bf16.msra.mxu0 0
    %330 = vmatpush.bf16.msra.mxu0 0
    %331 = vmatpush.bf16.msra.mxu0 0
    %332 = vmatpush.bf16.msra.mxu0 0
    %333 = vmatpush.bf16.msra.mxu0 0
    %334 = vmatpush.bf16.msra.mxu0 0
    %335 = vmatpush.bf16.msra.mxu0 %v305
    %336 = vmatpush.bf16.msra.mxu0 %v299
    %337 = vmatmul.bf16.gmra.mxu0 %v327
    %v338 = vpop.f32.mrf.mxu0
    %v339 = vadd.f32 %v313, %v338
    %v340 = vpop.f32.mrf.mxu0
    %v341 = vadd.f32 %v313, %v340
    %342 = vdwg.mxu0
    %343 = vmatpush.bf16.msra.mxu0 0
    %344 = vmatpush.bf16.msra.mxu0 0
    %345 = vmatpush.bf16.msra.mxu0 0
    %346 = vmatpush.bf16.msra.mxu0 0
    %347 = vmatpush.bf16.msra.mxu0 0
    %348 = vmatpush.bf16.msra.mxu0 0
    %349 = vmatpush.bf16.msra.mxu0 %v306
    %350 = vmatpush.bf16.msra.mxu0 %v300
    %351 = vmatmul.bf16.gmra.mxu0 %v327
    %v352 = vpop.f32.mrf.mxu0
    %v353 = vadd.f32 %v314, %v352
    %v354 = vpop.f32.mrf.mxu0
    %v355 = vadd.f32 %v314, %v354
    %356 = vdwg.mxu0
    %357 = vmatpush.bf16.msra.mxu0 0
    %358 = vmatpush.bf16.msra.mxu0 0
    %359 = vmatpush.bf16.msra.mxu0 0
    %360 = vmatpush.bf16.msra.mxu0 0
    %361 = vmatpush.bf16.msra.mxu0 0
    %362 = vmatpush.bf16.msra.mxu0 0
    %363 = vmatpush.bf16.msra.mxu0 %v307
    %364 = vmatpush.bf16.msra.mxu0 %v301
    %365 = vmatmul.bf16.gmra.mxu0 %v327
    %v366 = vpop.f32.mrf.mxu0
    %v367 = vadd.f32 %v315, %v366
    %v368 = vpop.f32.mrf.mxu0
    %v369 = vadd.f32 %v315, %v368
    %370 = vdwg.mxu0
    %371 = vmatpush.bf16.msra.mxu0 0
    %372 = vmatpush.bf16.msra.mxu0 0
    %373 = vmatpush.bf16.msra.mxu0 0
    %374 = vmatpush.bf16.msra.mxu0 0
    %375 = vmatpush.bf16.msra.mxu0 0
    %376 = vmatpush.bf16.msra.mxu0 0
    %377 = vmatpush.bf16.msra.mxu0 %v308
    %378 = vmatpush.bf16.msra.mxu0 %v302
    %379 = vmatmul.bf16.gmra.mxu0 %v327
    %v380 = vpop.f32.mrf.mxu0
    %v381 = vadd.f32 %v316, %v380
    %v382 = vpop.f32.mrf.mxu0
    %v383 = vadd.f32 %v316, %v382
    %384 = vdwg.mxu0
    %385 = vmatpush.bf16.msra.mxu0 0
    %386 = vmatpush.bf16.msra.mxu0 0
    %387 = vmatpush.bf16.msra.mxu0 0
    %388 = vmatpush.bf16.msra.mxu0 0
    %389 = vmatpush.bf16.msra.mxu0 0
    %390 = vmatpush.bf16.msra.mxu0 0
    %391 = vmatpush.bf16.msra.mxu0 %v309
    %392 = vmatpush.bf16.msra.mxu0 %v303
    %393 = vmatmul.bf16.gmra.mxu0 %v327
    %v394 = vpop.f32.mrf.mxu0
    %v395 = vadd.f32 %v317, %v394
    %v396 = vpop.f32.mrf.mxu0
    %v397 = vadd.f32 %v317, %v396
    %398 = vdwg.mxu0
    %399 = vmatpush.bf16.msra.mxu0 0
    %400 = vmatpush.bf16.msra.mxu0 0
    %401 = vmatpush.bf16.msra.mxu0 0
    %402 = vmatpush.bf16.msra.mxu0 0
    %403 = vmatpush.bf16.msra.mxu0 0
    %404 = vmatpush.bf16.msra.mxu0 0
    %405 = vmatpush.bf16.msra.mxu0 %v310
    %406 = vmatpush.bf16.msra.mxu0 %v304
    %407 = vmatmul.bf16.gmra.mxu0 %v327
    %v408 = vpop.f32.mrf.mxu0
    %v409 = vadd.f32 %v318, %v408
    %v410 = vpop.f32.mrf.mxu0
    %v411 = vadd.f32 %v318, %v410
    %412 = vdwg.mxu0
    %413 = vst [vmem:[#allocation2] sm:$0xff] %v339
    %414 = vst [vmem:[#allocation2 + $0x8] sm:$0xff] %v353
    %415 = vst [vmem:[#allocation2 + $0x10] sm:$0xff] %v367
    %416 = vst [vmem:[#allocation2 + $0x18] sm:$0xff] %v381
    %417 = vst [vmem:[#allocation2 + $0x20] sm:$0xff] %v395
    %418 = vst [vmem:[#allocation2 + $0x28] sm:$0xff] %v409
    %419 = vst [vmem:[#allocation2 + $0x30] sm:$0xff] %v341
    %420 = vst [vmem:[#allocation2 + $0x38] sm:$0xff] %v355
    %421 = vst [vmem:[#allocation2 + $0x40] sm:$0xff] %v369
    %422 = vst [vmem:[#allocation2 + $0x48] sm:$0xff] %v383
    %423 = vst [vmem:[#allocation2 + $0x50] sm:$0xff] %v397
    %424 = vst [vmem:[#allocation2 + $0x58] sm:$0xff] %v411
    // Predicated region
    $region22: #{bert_adapter.1} parent=1 // pred_check
      _
    $region23: #{bert_adapter.1} parent=1 // pred_check_branch
      %426 = sbr.rel (0) target = $region25
    $region24: #{bert_adapter.1} parent=1 // pred_region
      %428 = vsyncadd [#allocation3], 0
      %s429 = sshll.u32 [#allocation2], 4
      %s430 = int_to_ptr.vmem [resolvable:$true] %s429
      %s431 = sshll.u32 %s5, 4
      %s432 = int_to_ptr.hbm [resolvable:$true] %s431
      %437 = dma.vmem_to_hbm [thread:$0]  %s430, 1536, %s432, [#allocation3], 768, 768, 48
    $region25: #{bert_adapter.1} parent=1 // pred_fallthru
      _
    // Predicated region
    $region26: #{bert_adapter.1} parent=1 // pred_check
      _
    $region27: #{bert_adapter.1} parent=1 // pred_check_branch
      %439 = sbr.rel (0) target = $region29
    $region28: #{bert_adapter.1} parent=1 // pred_region
      %441 = dma.done [#allocation3], 1536
    $region29: #{bert_adapter.1} parent=1 // pred_fallthru
      _
    %442 = vsyncpa [#allocation3], 1

</llo_original>
